<compile_context>
chip_gen: v5e
topology: v5e:2x2
jax: 0.10.0
libtpu: 0.0.40
codegen_flags: <defaults>
</compile_context>

<pallas_src>
import math
from functools import partial

import jax
import jax.numpy as jnp
from jax.experimental import pallas as pl
from jax.experimental.pallas import tpu as pltpu

# module constants (from models/common.py)
ALPHA_INIT = 0.1
DECAY = 0.25
DT = 0.1
LENS = 0.5
THETA_0 = 0.5
TIME_WINDOW = 3

_LANE = 128
_SUBLANE = 8


def _mem_update_kernel(alpha_ref, x_ref, o_ref, *, act: bool):
    """x_ref/o_ref: (T, rows, cols) VMEM tiles (I/O dtype); alpha_ref: (1,1) f32 SMEM."""
    if not act:
        a = alpha_ref[0, 0]

    mem_old = None  # never read at i == 0
    # T = 3 is tiny and recurrent -> static unroll inside the kernel.
    for i in range(TIME_WINDOW):
        xi = x_ref[i].astype(jnp.float32)   # cast on the VMEM tile, not in HBM
        if i == 0:
            mem = xi
        else:
            mem = mem_old * DECAY + xi

        if act:
            # nn.SiLU(mem) = mem * sigmoid(mem); sigmoid via the exact tanh
            # identity so it rides the EUP tanh path (same unit as below).
            spike = mem * (0.5 * (jnp.tanh(0.5 * mem) + 1.0))
        else:
            if i == 0:
                # theta_0 - alpha * tanh(0/dt - 1.5)  (mem_old starts at zero)
                thresh = THETA_0 - a * math.tanh(-1.5)          # scalar
            else:
                thresh = THETA_0 - a * jnp.tanh(
                    jnp.abs(mem - mem_old) * (1.0 / DT) - 1.5)
            # spike_activation forward value: (mem > thr) - (mem < -thr)
            spike = ((mem > thresh).astype(jnp.float32)
                     - (mem < -thresh).astype(jnp.float32))

        mem_old = mem * (1.0 - spike)       # membrane reset, carried to next step
        o_ref[i] = spike.astype(o_ref.dtype)


def _round_up(v, m):
    return ((v + m - 1) // m) * m


def _choose_tile(extent, align, max_tile):
    """Largest aligned tile <= max_tile; small odd grids are rounded to an even
    block count so v7x's two TensorCores split the work evenly."""
    if extent <= align:
        return extent                      # single full-extent block (allowed)
    max_tile = max(align, (max_tile // align) * align)
    tile = min(max_tile, (extent // align) * align)
    grid = pl.cdiv(extent, tile)
    if grid < 8 and grid % 2 == 1:
        cand = max(align, _round_up(pl.cdiv(extent, grid + 1), align))
        if pl.cdiv(extent, cand) % 2 == 0:
            tile = cand
    return tile


def _vmem_limit_bytes(block_shape, io_itemsize):
    """Explicit scoped-VMEM budget: pipeline buffers + f32 compute temporaries."""
    t, r, c = block_shape
    r_pad = _round_up(r, _SUBLANE)
    c_pad = _round_up(c, _LANE)
    buf = t * r_pad * c_pad * io_itemsize   # one pipeline buffer (in or out)
    pipeline = 4 * buf                      # in + out, double-buffered
    # Live f32 full-tile temporaries per unrolled step: xi, mem, mem_old,
    # thresh, spike + one for scheduler slack (~6 tiles).
    temps = 6 * r_pad * c_pad * 4
    est = pipeline + temps + (2 << 20)
    # 32 MiB floor (>= all-gen scoped defaults), 48 MiB cap (safe on v7x's
    # 64 MiB physical VMEM as well as v5e/v6e's 128 MiB).
    return int(min(max(est, 32 << 20), 48 << 20))


def mem_update(x, alpha=ALPHA_INIT, act=False, max_block_rows=4096):
    """Pallas implementation of mem_update.forward.

    x: [T, ...] with T == TIME_WINDOW. Returns spikes with the same shape/dtype.
    """
    assert x.shape[0] == TIME_WINDOW, "leading axis must be the time window"
    orig_shape = x.shape
    orig_dtype = x.dtype
    T = TIME_WINDOW
    n = math.prod(x.shape[1:])

    # Keep the original dtype through HBM whenever the kernel can cast it on
    # the VMEM tile (float or integer); spikes {-1,0,+1} are exactly
    # representable either way.  Exotic dtypes (e.g. bool) fall back to f32.
    if jnp.issubdtype(orig_dtype, jnp.floating) or jnp.issubdtype(orig_dtype, jnp.integer):
        io_dtype = orig_dtype
    else:
        x = x.astype(jnp.float32)
        io_dtype = jnp.float32
    itemsize = jnp.dtype(io_dtype).itemsize

    max_block_rows = max(_SUBLANE, (int(max_block_rows) // _SUBLANE) * _SUBLANE)

    if n % _LANE == 0:
        # main path: pack rows densely into (8,128)-friendly (R, 128) tiles
        R = n // _LANE
        xk = x.reshape(T, R, _LANE)                      # contiguous, free
        tile_r = _choose_tile(R, _SUBLANE, max_block_rows)
        block = (T, tile_r, _LANE)
        grid = (pl.cdiv(R, tile_r),)
        index_map = lambda i: (0, i, 0)
    elif n % _SUBLANE == 0:
        # fill all 8 sublanes of each vreg; block along the lane axis
        C = n // _SUBLANE
        xk = x.reshape(T, _SUBLANE, C)
        max_cols = max(_LANE, (max_block_rows // _SUBLANE) * _LANE)
        tile_c = _choose_tile(C, _LANE, max_cols)
        block = (T, _SUBLANE, tile_c)
        grid = (pl.cdiv(C, tile_c),)
        index_map = lambda i: (0, 0, i)
    else:
        # truly ragged fallback: one sublane row, block along the lane axis
        xk = x.reshape(T, 1, n)
        max_cols = max(_LANE, max_block_rows * _LANE)
        tile_c = _choose_tile(n, _LANE, max_cols)
        block = (T, 1, tile_c)
        grid = (pl.cdiv(n, tile_c),)
        index_map = lambda i: (0, 0, i)

    alpha_arr = jnp.full((1, 1), alpha, dtype=jnp.float32)

    out = pl.pallas_call(
        partial(_mem_update_kernel, act=act),
        out_shape=jax.ShapeDtypeStruct(xk.shape, io_dtype),
        grid=grid,
        in_specs=[
            pl.BlockSpec(memory_space=pltpu.MemorySpace.SMEM),   # alpha scalar
            pl.BlockSpec(block, index_map),                      # x
        ],
        out_specs=pl.BlockSpec(block, index_map),
        compiler_params=pltpu.CompilerParams(
            dimension_semantics=("parallel",),
            vmem_limit_bytes=_vmem_limit_bytes(block, itemsize),
        ),
    )(alpha_arr, xk)

    out = out.reshape(orig_shape)
    if out.dtype != orig_dtype:
        out = out.astype(orig_dtype)
    return out


def _mem_update_ref(x, alpha=ALPHA_INIT, act=False):
    """Pure-JAX reference mirroring the PyTorch forward (values only)."""
    x = x.astype(jnp.float32)
    mem_old = jnp.zeros_like(x[0])
    outs = []
    for i in range(TIME_WINDOW):
        if i == 0:
            mem = x[0]
            thresh = THETA_0 - alpha * math.tanh(-1.5)
        else:
            mem = mem_old * DECAY + x[i]
            thresh = THETA_0 - alpha * jnp.tanh(
                jnp.abs(mem - mem_old) * (1.0 / DT) - 1.5)
        if act:
            spike = mem * jax.nn.sigmoid(mem)
        else:
            spike = ((mem > thresh).astype(mem.dtype)
                     - (mem < -thresh).astype(mem.dtype))
        mem_old = mem * (1.0 - spike)
        outs.append(spike)
    return jnp.stack(outs, axis=0)


if __name__ == "__main__":
    key = jax.random.PRNGKey(0)
    # [T, B, C, H, W] = [3, 2, 4, 16, 16]   (n = 2048, lane-aligned main path)
    x = jax.random.normal(key, (TIME_WINDOW, 2, 4, 16, 16), dtype=jnp.float32)

    # 1) spike path, f32
    out = jax.block_until_ready(mem_update(x, alpha=ALPHA_INIT, act=False))
    ref = _mem_update_ref(x, alpha=ALPHA_INIT, act=False)
    assert out.shape == x.shape and out.dtype == x.dtype
    assert jnp.max(jnp.abs(out - ref)) < 1e-5

    # 2) SiLU path, f32
    out_act = jax.block_until_ready(mem_update(x, alpha=ALPHA_INIT, act=True))
    ref_act = _mem_update_ref(x, alpha=ALPHA_INIT, act=True)
    assert jnp.max(jnp.abs(out_act - ref_act)) < 5e-3

    # 3) bf16 I/O (in-kernel cast; narrow HBM traffic)
    x_bf16 = x.astype(jnp.bfloat16)
    out_bf16 = jax.block_until_ready(mem_update(x_bf16, alpha=ALPHA_INIT, act=False))
    ref_bf16 = _mem_update_ref(x_bf16, alpha=ALPHA_INIT, act=False)
    assert out_bf16.dtype == jnp.bfloat16 and out_bf16.shape == x_bf16.shape
    assert jnp.max(jnp.abs(out_bf16.astype(jnp.float32) - ref_bf16)) < 1e-5

    # 4) n % 8 == 0 but n % 128 != 0: sublane-filled (T, 8, n//8) fallback
    x_sub = jax.random.normal(
        jax.random.PRNGKey(2), (TIME_WINDOW, 2, 4, 4, 11), dtype=jnp.float32)  # n = 352
    out_s = jax.block_until_ready(mem_update(x_sub, alpha=ALPHA_INIT, act=False))
    ref_s = _mem_update_ref(x_sub, alpha=ALPHA_INIT, act=False)
    assert out_s.shape == x_sub.shape
    assert jnp.max(jnp.abs(out_s - ref_s)) < 1e-5

    # 5) truly ragged (n not a multiple of 8) fallback path
    x_ragged = jax.random.normal(
        jax.random.PRNGKey(1), (TIME_WINDOW, 2, 3, 5, 7), dtype=jnp.float32)   # n = 210
    out_r = jax.block_until_ready(mem_update(x_ragged, alpha=ALPHA_INIT, act=False))
    ref_r = _mem_update_ref(x_ragged, alpha=ALPHA_INIT, act=False)
    assert out_r.shape == x_ragged.shape
    assert jnp.max(jnp.abs(out_r - ref_r)) < 1e-5

    print("KERNEL_OK")
</pallas_src>

<mosaic_0001>
module attributes {stable_mosaic.version = 11 : i64} {
  func.func @_mem_update_kernel(%arg0: i32, %arg1: memref<1x1xf32, #tpu.memory_space<smem>>, %arg2: memref<3x8x128xf32, #tpu.memory_space<vmem>>, %arg3: memref<3x8x128xf32, #tpu.memory_space<vmem>>) attributes {dimension_semantics = [#tpu.dimension_semantics<parallel>], iteration_bounds = array<i64: 2>, scalar_prefetch = 0 : i64, scratch_operands = 0 : i64, tpu.core_type = #tpu.core_type<tc>, window_params = [{transform_indices = @transform_0, window_bounds = array<i64: 1, 1>}, {transform_indices = @transform_1, window_bounds = array<i64: 3, 8, 128>}, {transform_indices = @transform_2, window_bounds = array<i64: 3, 8, 128>}]} {
    %c0 = arith.constant 0 : index
    %c0_0 = arith.constant 0 : index
    %0 = memref.load %arg1[%c0, %c0_0] : memref<1x1xf32, #tpu.memory_space<smem>>
    %c0_1 = arith.constant 0 : index
    %c0_2 = arith.constant 0 : index
    %c0_3 = arith.constant 0 : index
    %1 = vector.load %arg2[%c0_1, %c0_2, %c0_3] : memref<3x8x128xf32, #tpu.memory_space<vmem>>, vector<1x8x128xf32>
    %2 = vector.shape_cast %1 : vector<1x8x128xf32> to vector<8x128xf32>
    %cst = arith.constant -0.905148268 : f32
    %3 = arith.mulf %0, %cst : f32
    %cst_4 = arith.constant 5.000000e-01 : f32
    %4 = arith.subf %cst_4, %3 : f32
    %5 = vector.broadcast %4 : f32 to vector<8x128xf32>
    %6 = arith.cmpf ogt, %2, %5 : vector<8x128xf32>
    %7 = arith.extui %6 : vector<8x128xi1> to vector<8x128xi32>
    %8 = arith.sitofp %7 : vector<8x128xi32> to vector<8x128xf32>
    %cst_5 = arith.constant 0.000000e+00 : f32
    %9 = arith.subf %cst_5, %4 : f32
    %10 = vector.broadcast %9 : f32 to vector<8x128xf32>
    %11 = arith.cmpf olt, %2, %10 : vector<8x128xf32>
    %12 = arith.extui %11 : vector<8x128xi1> to vector<8x128xi32>
    %13 = arith.sitofp %12 : vector<8x128xi32> to vector<8x128xf32>
    %14 = arith.subf %8, %13 : vector<8x128xf32>
    %cst_6 = arith.constant 1.000000e+00 : f32
    %15 = vector.broadcast %cst_6 : f32 to vector<8x128xf32>
    %16 = arith.subf %15, %14 : vector<8x128xf32>
    %17 = arith.mulf %2, %16 : vector<8x128xf32>
    %c0_7 = arith.constant 0 : index
    %c0_8 = arith.constant 0 : index
    %c0_9 = arith.constant 0 : index
    %18 = vector.load %arg3[%c0_7, %c0_8, %c0_9] : memref<3x8x128xf32, #tpu.memory_space<vmem>>, vector<1x8x128xf32>
    %19 = vector.shape_cast %18 : vector<1x8x128xf32> to vector<8x128xf32>
    %20 = vector.shape_cast %14 : vector<8x128xf32> to vector<1x8x128xf32>
    tpu.vector_store %arg3[%c0_7, %c0_8, %c0_9], %20 {strides = array<i32>} : memref<3x8x128xf32, #tpu.memory_space<vmem>>, vector<1x8x128xf32>,
    %c1 = arith.constant 1 : index
    %c0_10 = arith.constant 0 : index
    %c0_11 = arith.constant 0 : index
    %21 = vector.load %arg2[%c1, %c0_10, %c0_11] : memref<3x8x128xf32, #tpu.memory_space<vmem>>, vector<1x8x128xf32>
    %22 = vector.shape_cast %21 : vector<1x8x128xf32> to vector<8x128xf32>
    %cst_12 = arith.constant 2.500000e-01 : f32
    %23 = vector.broadcast %cst_12 : f32 to vector<8x128xf32>
    %24 = arith.mulf %17, %23 : vector<8x128xf32>
    %25 = arith.addf %24, %22 : vector<8x128xf32>
    %26 = arith.subf %25, %17 : vector<8x128xf32>
    %27 = math.absf %26 : vector<8x128xf32>
    %cst_13 = arith.constant 1.000000e+01 : f32
    %28 = vector.broadcast %cst_13 : f32 to vector<8x128xf32>
    %29 = arith.mulf %27, %28 : vector<8x128xf32>
    %cst_14 = arith.constant 1.500000e+00 : f32
    %30 = vector.broadcast %cst_14 : f32 to vector<8x128xf32>
    %31 = arith.subf %29, %30 : vector<8x128xf32>
    %32 = math.tanh %31 : vector<8x128xf32>
    %33 = vector.broadcast %0 : f32 to vector<8x128xf32>
    %34 = arith.mulf %33, %32 : vector<8x128xf32>
    %cst_15 = arith.constant 5.000000e-01 : f32
    %35 = vector.broadcast %cst_15 : f32 to vector<8x128xf32>
    %36 = arith.subf %35, %34 : vector<8x128xf32>
    %37 = arith.cmpf ogt, %25, %36 : vector<8x128xf32>
    %38 = arith.extui %37 : vector<8x128xi1> to vector<8x128xi32>
    %39 = arith.sitofp %38 : vector<8x128xi32> to vector<8x128xf32>
    %cst_16 = arith.constant 0.000000e+00 : f32
    %40 = vector.broadcast %cst_16 : f32 to vector<8x128xf32>
    %41 = arith.subf %40, %36 : vector<8x128xf32>
    %42 = arith.cmpf olt, %25, %41 : vector<8x128xf32>
    %43 = arith.extui %42 : vector<8x128xi1> to vector<8x128xi32>
    %44 = arith.sitofp %43 : vector<8x128xi32> to vector<8x128xf32>
    %45 = arith.subf %39, %44 : vector<8x128xf32>
    %cst_17 = arith.constant 1.000000e+00 : f32
    %46 = vector.broadcast %cst_17 : f32 to vector<8x128xf32>
    %47 = arith.subf %46, %45 : vector<8x128xf32>
    %48 = arith.mulf %25, %47 : vector<8x128xf32>
    %c1_18 = arith.constant 1 : index
    %c0_19 = arith.constant 0 : index
    %c0_20 = arith.constant 0 : index
    %49 = vector.load %arg3[%c1_18, %c0_19, %c0_20] : memref<3x8x128xf32, #tpu.memory_space<vmem>>, vector<1x8x128xf32>
    %50 = vector.shape_cast %49 : vector<1x8x128xf32> to vector<8x128xf32>
    %51 = vector.shape_cast %45 : vector<8x128xf32> to vector<1x8x128xf32>
    tpu.vector_store %arg3[%c1_18, %c0_19, %c0_20], %51 {strides = array<i32>} : memref<3x8x128xf32, #tpu.memory_space<vmem>>, vector<1x8x128xf32>,
    %c2 = arith.constant 2 : index
    %c0_21 = arith.constant 0 : index
    %c0_22 = arith.constant 0 : index
    %52 = vector.load %arg2[%c2, %c0_21, %c0_22] : memref<3x8x128xf32, #tpu.memory_space<vmem>>, vector<1x8x128xf32>
    %53 = vector.shape_cast %52 : vector<1x8x128xf32> to vector<8x128xf32>
    %cst_23 = arith.constant 2.500000e-01 : f32
    %54 = vector.broadcast %cst_23 : f32 to vector<8x128xf32>
    %55 = arith.mulf %48, %54 : vector<8x128xf32>
    %56 = arith.addf %55, %53 : vector<8x128xf32>
    %57 = arith.subf %56, %48 : vector<8x128xf32>
    %58 = math.absf %57 : vector<8x128xf32>
    %cst_24 = arith.constant 1.000000e+01 : f32
    %59 = vector.broadcast %cst_24 : f32 to vector<8x128xf32>
    %60 = arith.mulf %58, %59 : vector<8x128xf32>
    %cst_25 = arith.constant 1.500000e+00 : f32
    %61 = vector.broadcast %cst_25 : f32 to vector<8x128xf32>
    %62 = arith.subf %60, %61 : vector<8x128xf32>
    %63 = math.tanh %62 : vector<8x128xf32>
    %64 = vector.broadcast %0 : f32 to vector<8x128xf32>
    %65 = arith.mulf %64, %63 : vector<8x128xf32>
    %cst_26 = arith.constant 5.000000e-01 : f32
    %66 = vector.broadcast %cst_26 : f32 to vector<8x128xf32>
    %67 = arith.subf %66, %65 : vector<8x128xf32>
    %68 = arith.cmpf ogt, %56, %67 : vector<8x128xf32>
    %69 = arith.extui %68 : vector<8x128xi1> to vector<8x128xi32>
    %70 = arith.sitofp %69 : vector<8x128xi32> to vector<8x128xf32>
    %cst_27 = arith.constant 0.000000e+00 : f32
    %71 = vector.broadcast %cst_27 : f32 to vector<8x128xf32>
    %72 = arith.subf %71, %67 : vector<8x128xf32>
    %73 = arith.cmpf olt, %56, %72 : vector<8x128xf32>
    %74 = arith.extui %73 : vector<8x128xi1> to vector<8x128xi32>
    %75 = arith.sitofp %74 : vector<8x128xi32> to vector<8x128xf32>
    %76 = arith.subf %70, %75 : vector<8x128xf32>
    %c2_28 = arith.constant 2 : index
    %c0_29 = arith.constant 0 : index
    %c0_30 = arith.constant 0 : index
    %77 = vector.load %arg3[%c2_28, %c0_29, %c0_30] : memref<3x8x128xf32, #tpu.memory_space<vmem>>, vector<1x8x128xf32>
    %78 = vector.shape_cast %77 : vector<1x8x128xf32> to vector<8x128xf32>
    %79 = vector.shape_cast %76 : vector<8x128xf32> to vector<1x8x128xf32>
    tpu.vector_store %arg3[%c2_28, %c0_29, %c0_30], %79 {strides = array<i32>} : memref<3x8x128xf32, #tpu.memory_space<vmem>>, vector<1x8x128xf32>,
    return
  }
  func.func @transform_0(%arg0: i32) -> (i32, i32) {
    %c0_i32 = arith.constant 0 : i32
    %c0_i32_0 = arith.constant 0 : i32
    %c0_i32_1 = arith.constant 0 : i32
    return %c0_i32, %c0_i32_0 : i32, i32
  }
  func.func @transform_1(%arg0: i32) -> (i32, i32, i32) {
    %c0_i32 = arith.constant 0 : i32
    %c0_i32_0 = arith.constant 0 : i32
    %c0_i32_1 = arith.constant 0 : i32
    return %c0_i32, %arg0, %c0_i32_0 : i32, i32, i32
  }
  func.func @transform_2(%arg0: i32) -> (i32, i32, i32) {
    %c0_i32 = arith.constant 0 : i32
    %c0_i32_0 = arith.constant 0 : i32
    %c0_i32_1 = arith.constant 0 : i32
    return %c0_i32, %arg0, %c0_i32_0 : i32, i32, i32
  }
}

</mosaic_0001>

<llo_original>
// kernel: tpu_custom_call.1
$region0: #{tpu_custom_call.1}
  #allocation0 [shape = 'u32[]', space=smem, size = 0x4, offset = 0x4, fixed_abs, tag = 'smem constant byte address 0x4 - core index']
  #allocation1 [shape = 'u32[72,128]{1,0:T(1,128)}', space=vmem, size = 0x9000, scoped, tag = 'internal scratch']
  #allocation2 [shape = 'f32[1,1]{1,0:T(1,128)S(6)}', space=smem, size = 0x200, scoped, tag = 'scoped memory for tpu_custom_call.1']
  %s0 = inlined_call_operand.<no memory space> [shape: f32[1,1], index: 0, kind: input, shape index: {}]
  %s1 = inlined_call_operand.hbm [shape: f32[3,16,128], index: 1, kind: input, shape index: {}]
  %s2 = inlined_call_operand.hbm [shape: f32[3,16,128], index: 2, kind: output, shape index: {}]
  %s3 = sld [smem:[#allocation0]]
  $region45: #{tpu_custom_call.1} parent=0
    _
  %s5 = ssub.s32 1, %s3
  %s6 = scalar_select 0, %s5, %s3
  %7 = sst [smem:[#allocation2]] %s0
  $region1: #{tpu_custom_call.1} parent=0
    #allocation3 [shape = 'u8[24576]{0}', space=vmem, size = 0x6000, scoped, tag = 'input window, operand 1']
    #allocation4 [shape = 's32[2]{0}', space=sflag, size = 0x8, scoped, tag = 'scoped memory for tpu_custom_call.1']
    #allocation5 [shape = 's32[2]{0}', space=sflag, size = 0x8, scoped, tag = 'scoped memory for tpu_custom_call.1']
    #allocation6 [shape = 'u8[24576]{0}', space=vmem, size = 0x6000, scoped, tag = 'output window, operand 0']
    %8 = vsyncpa [#allocation4], 0
    %s9 = scalar_lea.sflag [#allocation4], 1
    %10 = vsyncpa %s9, 0
    %11 = vsyncpa [#allocation5], 0
    %s12 = scalar_lea.sflag [#allocation5], 1
    %13 = vsyncpa %s12, 0
    loop: start=0, step=1, limit=4
    $region2: #{tpu_custom_call.1} parent=1 // loop_pre_header
      _
    $region3: #{tpu_custom_call.1} parent=1 // loop_header
      %s15 = sphi 0, %s19
      %p16 = scmp.ge.s32.totalorder %s15, 4
      %s23 = sphi 0, %s23
      %s25 = sphi 0, %s23
      %s26 = sphi 0, %s25
      %s40 = sphi 0, %s26
      %s46 = sphi 0, %s48
      %s49 = sphi 0, %s46
      %s50 = sphi 0, %s49
      %s66 = sphi 0, %s50
      %s72 = sphi 0, %s74
      %s75 = sphi 0, %s72
      %s76 = sphi 0, %s75
      %s92 = sphi 0, %s76
    $region4: #{tpu_custom_call.1} parent=1 // loop_header_branch
      %18 = sbr.rel (%p16) target = $region8
    $region5: #{tpu_custom_call.1} parent=1 // loop_body
      %s20 = ssub.s32 %s15, 1
      %s21 = ssub.s32 %s15, 2
      %s22 = sadd.s32 %s15, 1
      %s24 = sadd.s32 %s23, 1
      %p27 = scmp.eq.s32.totalorder %s15, 1
      %p28 = scmp.ne.s32.totalorder %s23, %s25
      %p29 = scmp.eq.s32.totalorder %s15, 0
      %p30 = por %p28, %p29
      %p31 = scmp.ne.s32.totalorder %s23, %s25
      %p32 = scmp.eq.s32.totalorder %s20, 1
      %p33 = por %p31, %p32
      %p34 = scmp.ne.s32.totalorder %s25, %s26
      %p35 = scmp.eq.s32.totalorder %s20, 0
      %p36 = por %p34, %p35
      %p37 = scmp.ne.s32.totalorder %s25, %s26
      %p38 = scmp.eq.s32.totalorder %s21, 1
      %p39 = por %p37, %p38
      %p41 = scmp.ne.s32.totalorder %s26, %s40
      %p42 = scmp.eq.s32.totalorder %s21, 0
      %p43 = por %p41, %p42
      %s44 = ssub.s32 %s15, %s22
      %p45 = scmp.eq.s32.totalorder %s44, 0
      %s47 = sadd.s32 %s46, 1
      %s48 = scalar_select %p45, %s46, %s47
      %p51 = pneg %p45
      %p52 = scmp.eq.s32.totalorder %s15, 1
      %p53 = por %p51, %p52
      %p54 = scmp.ne.s32.totalorder %s46, %s49
      %p55 = scmp.eq.s32.totalorder %s15, 0
      %p56 = por %p54, %p55
      %p57 = scmp.ne.s32.totalorder %s46, %s49
      %p58 = scmp.eq.s32.totalorder %s20, 1
      %p59 = por %p57, %p58
      %p60 = scmp.ne.s32.totalorder %s49, %s50
      %p61 = scmp.eq.s32.totalorder %s20, 0
      %p62 = por %p60, %p61
      %p63 = scmp.ne.s32.totalorder %s49, %s50
      %p64 = scmp.eq.s32.totalorder %s21, 1
      %p65 = por %p63, %p64
      %p67 = scmp.ne.s32.totalorder %s50, %s66
      %p68 = scmp.eq.s32.totalorder %s21, 0
      %p69 = por %p67, %p68
      %s70 = ssub.s32 %s15, %s22
      %p71 = scmp.eq.s32.totalorder %s70, 0
      %s73 = sadd.s32 %s72, 1
      %s74 = scalar_select %p71, %s72, %s73
      %p77 = pneg %p71
      %p78 = scmp.eq.s32.totalorder %s15, 1
      %p79 = por %p77, %p78
      %p80 = scmp.ne.s32.totalorder %s72, %s75
      %p81 = scmp.eq.s32.totalorder %s15, 0
      %p82 = por %p80, %p81
      %p83 = scmp.ne.s32.totalorder %s72, %s75
      %p84 = scmp.eq.s32.totalorder %s20, 1
      %p85 = por %p83, %p84
      %p86 = scmp.ne.s32.totalorder %s75, %s76
      %p87 = scmp.eq.s32.totalorder %s20, 0
      %p88 = por %p86, %p87
      %p89 = scmp.ne.s32.totalorder %s75, %s76
      %p90 = scmp.eq.s32.totalorder %s21, 1
      %p91 = por %p89, %p90
      %p93 = scmp.ne.s32.totalorder %s76, %s92
      %p94 = scmp.eq.s32.totalorder %s21, 0
      %p95 = por %p93, %p94
      %p96 = scmp.le.s32.totalorder 1, %s15
      %p97 = scmp.lt.s32.totalorder %s15, 3
      %p98 = pnand %p96, %p97
      %p99 = pneg %p98
      // Predicated region
      $region9: #{tpu_custom_call.1} parent=5 // pred_check
        _
      $region10: #{tpu_custom_call.1} parent=5 // pred_check_branch
        %101 = sbr.rel (%p98) target = $region12
      $region11: #{tpu_custom_call.1} parent=5 // pred_region
        %s102 = ssub.s32 %s15, 1
        // Predicated region
        $region13: #{tpu_custom_call.1} parent=11 // pred_check
          %p103 = pneg %p36
        $region14: #{tpu_custom_call.1} parent=11 // pred_check_branch
          %105 = sbr.rel (%p103) target = $region16
        $region15: #{tpu_custom_call.1} parent=11 // pred_region
          _
        $region16: #{tpu_custom_call.1} parent=11 // pred_fallthru
          _
      $region12: #{tpu_custom_call.1} parent=5 // pred_fallthru
        _
      %p106 = scmp.lt.s32.totalorder %s15, 2
      // Predicated region
      $region17: #{tpu_custom_call.1} parent=5 // pred_check
        %p107 = pneg %p106
      $region18: #{tpu_custom_call.1} parent=5 // pred_check_branch
        %109 = sbr.rel (%p107) target = $region20
      $region19: #{tpu_custom_call.1} parent=5 // pred_region
        // Predicated region
        $region21: #{tpu_custom_call.1} parent=19 // pred_check
          %p110 = pneg %p56
        $region22: #{tpu_custom_call.1} parent=19 // pred_check_branch
          %112 = sbr.rel (%p110) target = $region24
        $region23: #{tpu_custom_call.1} parent=19 // pred_region
          %s113 = sand.u32 %s46, 1
          %s114 = scalar_lea.sflag [#allocation4], %s113
          %s115 = sand.u32 %s46, 1
          %s116 = smul.addr %s115, 24
          %s117 = scalar_lea.vmem [#allocation3], %s116
          %119 = vsyncadd %s114, 0
          %s120 = smul.addr %s15, 8
          %s121 = scalar_lea.hbm %s1, %s120
          %s122 = sshll.u32 %s121, 4
          %s123 = int_to_ptr.hbm [resolvable:$true] %s122
          %s124 = sshll.u32 %s117, 4
          %s125 = int_to_ptr.vmem [resolvable:$true] %s124
          %130 = dma.hbm_to_vmem [thread:$0]  %s123, 384, %s125, %s114, 256, 128, 8
        $region24: #{tpu_custom_call.1} parent=19 // pred_fallthru
          _
      $region20: #{tpu_custom_call.1} parent=5 // pred_fallthru
        _
      %p131 = scmp.le.s32.totalorder 1, %s15
      %p132 = scmp.lt.s32.totalorder %s15, 3
      %p133 = pnand %p131, %p132
      %p134 = pneg %p133
      // Predicated region
      $region25: #{tpu_custom_call.1} parent=5 // pred_check
        _
      $region26: #{tpu_custom_call.1} parent=5 // pred_check_branch
        %136 = sbr.rel (%p133) target = $region28
      $region27: #{tpu_custom_call.1} parent=5 // pred_region
        %s137 = ssub.s32 %s15, 1
        %s138 = sand.u32 %s49, 1
        %s139 = scalar_lea.sflag [#allocation4], %s138
        %s140 = sand.u32 %s49, 1
        %s141 = smul.addr %s140, 24
        %s142 = scalar_lea.vmem [#allocation3], %s141
        // Predicated region
        $region29: #{tpu_custom_call.1} parent=27 // pred_check
          %p143 = pneg %p62
        $region30: #{tpu_custom_call.1} parent=27 // pred_check_branch
          %145 = sbr.rel (%p143) target = $region32
        $region31: #{tpu_custom_call.1} parent=27 // pred_region
          %147 = dma.done %s139, 384
        $region32: #{tpu_custom_call.1} parent=27 // pred_fallthru
          _
        %p148 = pneg %p36
        %p149 = pneg %p33
        %s150 = sand.u32 %s49, 1
        %s151 = scalar_lea.sflag [#allocation4], %s150
        %s152 = sand.u32 %s49, 1
        %s153 = smul.addr %s152, 24
        %s154 = scalar_lea.vmem [#allocation3], %s153
        %p155 = pneg %p62
        %p156 = pneg %p59
        %p157 = pneg %p88
        %p158 = pneg %p85
        %s159 = sand.u32 %s75, 1
        %s160 = scalar_lea.sflag [#allocation5], %s159
        %s161 = sand.u32 %s75, 1
        %s162 = smul.addr %s161, 24
        %s163 = scalar_lea.vmem [#allocation6], %s162
        %s164 = sld [smem:[#allocation2]]
        %v165 = vld [vmem:[%s142] sm:$0xff]
        %s166 = smul.f32 %s164, -0.90514827
        %s167 = ssub.f32 0.5, %s166
        %v168 = vstv %s167
        %vm169 = vcmp.gt.f32.partialorder %v165, %v168
        %v170 = vsel %vm169, 1, 0
        %v171 = vcvt.s32.f32 %v170
        %s172 = ssub.f32 0.0, %s167
        %v173 = vstv %s172
        %vm174 = vcmp.lt.f32.partialorder %v165, %v173
        %v175 = vsel %vm174, 1, 0
        %v176 = vcvt.s32.f32 %v175
        %v177 = vsub.f32 %v171, %v176
        %v178 = vsub.f32 1.0, %v177
        %v179 = vmul.f32 %v165, %v178
        %180 = vst [vmem:[%s163] sm:$0xff] %v177
        %s181 = scalar_lea.vmem %s142, 8 [#allocation3]
        %v182 = vld [vmem:[%s181] sm:$0xff]
        %v183 = vmul.f32 %v179, 0.25
        %v184 = vadd.f32 %v183, %v182
        %v185 = vsub.f32 %v184, %v179
        %v186 = vand.u32 2147483647, %v185
        %v187 = vmul.f32 %v186, 10.0
        %v188 = vsub.f32 %v187, 1.5
        %v189 = vtanh.pop %v188
        %v190 = vstv %s164
        %v191 = vmul.f32 %v190, %v189
        %v192 = vsub.f32 0.5, %v191
        %vm193 = vcmp.gt.f32.partialorder %v184, %v192
        %v194 = vsel %vm193, 1, 0
        %v195 = vcvt.s32.f32 %v194
        %v196 = vsub.f32 0.0, %v192
        %vm197 = vcmp.lt.f32.partialorder %v184, %v196
        %v198 = vsel %vm197, 1, 0
        %v199 = vcvt.s32.f32 %v198
        %v200 = vsub.f32 %v195, %v199
        %v201 = vsub.f32 1.0, %v200
        %v202 = vmul.f32 %v184, %v201
        %s203 = scalar_lea.vmem %s163, 8 [#allocation6]
        %204 = vst [vmem:[%s203] sm:$0xff] %v200
        %s205 = scalar_lea.vmem %s142, 16 [#allocation3]
        %v206 = vld [vmem:[%s205] sm:$0xff]
        %v207 = vmul.f32 %v202, 0.25
        %v208 = vadd.f32 %v207, %v206
        %v209 = vsub.f32 %v208, %v202
        %v210 = vand.u32 2147483647, %v209
        %v211 = vmul.f32 %v210, 10.0
        %v212 = vsub.f32 %v211, 1.5
        %v213 = vtanh.pop %v212
        %v214 = vmul.f32 %v190, %v213
        %v215 = vsub.f32 0.5, %v214
        %vm216 = vcmp.gt.f32.partialorder %v208, %v215
        %v217 = vsel %vm216, 1, 0
        %v218 = vcvt.s32.f32 %v217
        %v219 = vsub.f32 0.0, %v215
        %vm220 = vcmp.lt.f32.partialorder %v208, %v219
        %v221 = vsel %vm220, 1, 0
        %v222 = vcvt.s32.f32 %v221
        %v223 = vsub.f32 %v218, %v222
        %s224 = scalar_lea.vmem %s163, 16 [#allocation6]
        %225 = vst [vmem:[%s224] sm:$0xff] %v223
        %s226 = sand.u32 %s75, 1
        %s227 = scalar_lea.sflag [#allocation5], %s226
        %s228 = sand.u32 %s75, 1
        %s229 = smul.addr %s228, 24
        %s230 = scalar_lea.vmem [#allocation6], %s229
        // Predicated region
        $region33: #{tpu_custom_call.1} parent=27 // pred_check
          %p231 = pneg %p85
        $region34: #{tpu_custom_call.1} parent=27 // pred_check_branch
          %233 = sbr.rel (%p231) target = $region36
        $region35: #{tpu_custom_call.1} parent=27 // pred_region
          %235 = vsyncadd %s227, 0
          %s236 = smul.addr %s20, 8
          %s237 = scalar_lea.hbm %s2, %s236
          %s238 = sshll.u32 %s230, 4
          %s239 = int_to_ptr.vmem [resolvable:$true] %s238
          %s240 = sshll.u32 %s237, 4
          %s241 = int_to_ptr.hbm [resolvable:$true] %s240
          %246 = dma.vmem_to_hbm [thread:$0]  %s239, 384, %s241, %s227, 128, 256, 8
        $region36: #{tpu_custom_call.1} parent=27 // pred_fallthru
          _
      $region28: #{tpu_custom_call.1} parent=5 // pred_fallthru
        _
      %p247 = scmp.le.s32.totalorder 2, %s15
      // Predicated region
      $region37: #{tpu_custom_call.1} parent=5 // pred_check
        %p248 = pneg %p247
      $region38: #{tpu_custom_call.1} parent=5 // pred_check_branch
        %250 = sbr.rel (%p248) target = $region40
      $region39: #{tpu_custom_call.1} parent=5 // pred_region
        %s251 = ssub.s32 %s15, 2
        // Predicated region
        $region41: #{tpu_custom_call.1} parent=39 // pred_check
          %p252 = pneg %p91
        $region42: #{tpu_custom_call.1} parent=39 // pred_check_branch
          %254 = sbr.rel (%p252) target = $region44
        $region43: #{tpu_custom_call.1} parent=39 // pred_region
          %s255 = sand.u32 %s76, 1
          %s256 = scalar_lea.sflag [#allocation5], %s255
          %s257 = sand.u32 %s76, 1
          %s258 = smul.addr %s257, 24
          %s259 = scalar_lea.vmem [#allocation6], %s258
          %261 = dma.done %s256, 384
        $region44: #{tpu_custom_call.1} parent=39 // pred_fallthru
          _
      $region40: #{tpu_custom_call.1} parent=5 // pred_fallthru
        _
    $region6: #{tpu_custom_call.1} parent=1 // loop_footer
      %s19 = sadd.s32 1, %s15
    $region7: #{tpu_custom_call.1} parent=1 // loop_footer_branch
      %14 = sbr.rel target = $region3
    $region8: #{tpu_custom_call.1} parent=1 // loop_exit
      _
    %262 = vsyncpa [#allocation4], 1
    %s263 = scalar_lea.sflag [#allocation4], 1
    %264 = vsyncpa %s263, 1
    %265 = vsyncpa [#allocation5], 1
    %s266 = scalar_lea.sflag [#allocation5], 1
    %267 = vsyncpa %s266, 1

</llo_original>
